<compile_context>
chip_gen: v6e
topology: v6e:2x2x1
jax: 0.10.0
libtpu: 0.0.40
codegen_flags: <defaults>
</compile_context>

<pallas_src>
from functools import partial

import jax
import jax.numpy as jnp
import numpy as np
from jax.experimental import pallas as pl
from jax.experimental.pallas import tpu as pltpu


def _round_up(x, m):
    return ((x + m - 1) // m) * m


def _pad2(a, rows, cols):
    pr, pc = rows - a.shape[0], cols - a.shape[1]
    if pr or pc:
        a = jnp.pad(a, ((0, pr), (0, pc)))
    return a


def _softplus(x):
    # Stable softplus: never exponentiates large positives.
    return jnp.where(x > 20.0, x, jnp.log1p(jnp.exp(jnp.minimum(x, 20.0))))


# ---------------------------------------------------------------------------
# Fused kernel: sampled linear layer + KL reduction in one pass over weights.
# ---------------------------------------------------------------------------
def _fused_hbl_kernel(x_ref, wmu_ref, wrho_ref, epsw_ref,
                      bmu_ref, brho_ref, epsb_ref,
                      pmu_ref, plv_ref, inv2v_ref,
                      y_ref, kl_ref,
                      acc_ref, kl_acc_ref,
                      *, out_features, in_features, tn, tk, mask_w, mask_b):
    i = pl.program_id(0)          # batch tile
    j = pl.program_id(1)          # out-feature tile
    k = pl.program_id(2)          # in-feature (reduction) tile
    ni = pl.num_programs(0)
    nj = pl.num_programs(1)
    nk = pl.num_programs(2)

    prior_mu = pmu_ref[0, 0]
    prior_logvar = plv_ref[0, 0]
    inv_2var = inv2v_ref[0, 0]            # 0.5 * exp(-prior_logvar), host-side
    log_prior_std = 0.5 * prior_logvar    # log(sqrt(exp(logvar)))

    # ---- init accumulators -------------------------------------------------
    @pl.when((i == 0) & (j == 0) & (k == 0))
    def _():
        kl_acc_ref[...] = jnp.zeros_like(kl_acc_ref)

    @pl.when(k == 0)
    def _():
        acc_ref[...] = jnp.zeros_like(acc_ref)

    # ---- sample weights once; reuse sigma for sample and KL ----------------
    w_mu = wmu_ref[...]
    w_sigma = _softplus(wrho_ref[...])
    w = w_mu + w_sigma * epsw_ref[...]

    # y_tile += x_tile @ w_tile.T   (weights in natural (out, in) layout)
    acc_ref[...] += jax.lax.dot_general(
        x_ref[...], w,
        dimension_numbers=(((1,), (1,)), ((), ())),
        preferred_element_type=jnp.float32)

    # ---- weight KL: only on the first batch-tile sweep ---------------------
    @pl.when(i == 0)
    def _():
        kl_w = (log_prior_std - jnp.log(w_sigma)
                + (w_sigma * w_sigma + (w_mu - prior_mu) ** 2) * inv_2var
                - 0.5)
        if mask_w:  # static: mask padded rows/cols out of the KL sum
            rows = jax.lax.broadcasted_iota(jnp.int32, (tn, tk), 0) + j * tn
            cols = jax.lax.broadcasted_iota(jnp.int32, (tn, tk), 1) + k * tk
            kl_w = jnp.where((rows < out_features) & (cols < in_features),
                             kl_w, 0.0)
        kl_acc_ref[...] = kl_acc_ref[...] + jnp.sum(kl_w)

    # ---- bias: KL once per out-tile; sample + add on the last K step -------
    b_mu = bmu_ref[...]
    b_sigma = _softplus(brho_ref[...])

    @pl.when((i == 0) & (k == 0))
    def _():
        kl_b = (log_prior_std - jnp.log(b_sigma)
                + (b_sigma * b_sigma + (b_mu - prior_mu) ** 2) * inv_2var
                - 0.5)
        if mask_b:
            cols = jax.lax.broadcasted_iota(jnp.int32, (1, tn), 1) + j * tn
            kl_b = jnp.where(cols < out_features, kl_b, 0.0)
        kl_acc_ref[...] = kl_acc_ref[...] + jnp.sum(kl_b)

    @pl.when(k == nk - 1)
    def _():
        b = b_mu + b_sigma * epsb_ref[...]          # (1, tn) broadcast
        y_ref[...] = acc_ref[...] + b

    # ---- finalize KL on the very last grid step -----------------------------
    @pl.when((i == ni - 1) & (j == nj - 1) & (k == nk - 1))
    def _():
        kl_ref[...] = (kl_acc_ref[...]
                       + 0.5 * prior_mu * prior_mu
                       + 0.5 * prior_logvar * prior_logvar)


# ---------------------------------------------------------------------------
# Wrapper
# ---------------------------------------------------------------------------
def hierarchical_bayesian_linear_forward(x, params, key):
    """Returns (y, kl) matching the PyTorch module's forward (normal prior)."""
    weight_mu = params["weight_mu"].astype(jnp.float32)     # (out, in)
    weight_rho = params["weight_rho"].astype(jnp.float32)   # (out, in)
    bias_mu = params["bias_mu"].astype(jnp.float32)         # (out,)
    bias_rho = params["bias_rho"].astype(jnp.float32)       # (out,)
    prior_mu = params["prior_mu"].astype(jnp.float32)       # (1,)
    prior_logvar = params["prior_logvar"].astype(jnp.float32)  # (1,)

    out_features, in_features = weight_mu.shape
    batch = x.shape[0]

    k_w, k_b = jax.random.split(key)
    eps_w = jax.random.normal(k_w, weight_mu.shape, dtype=jnp.float32)
    eps_b = jax.random.normal(k_b, (out_features,), dtype=jnp.float32)

    # ---- tile sizes: lane-dense (multiples of 128) N/K, sublane-aligned M --
    tm = min(_round_up(batch, 8), 128)
    tn = min(_round_up(out_features, 128), 256)
    tk = min(_round_up(in_features, 128), 512)
    m_pad = _round_up(batch, tm)
    n_pad = _round_up(out_features, tn)
    k_pad = _round_up(in_features, tk)

    x_p = _pad2(x.astype(jnp.float32), m_pad, k_pad)
    wmu_p = _pad2(weight_mu, n_pad, k_pad)
    wrho_p = _pad2(weight_rho, n_pad, k_pad)
    epsw_p = _pad2(eps_w, n_pad, k_pad)
    bmu_p = _pad2(bias_mu.reshape(1, -1), 1, n_pad)
    brho_p = _pad2(bias_rho.reshape(1, -1), 1, n_pad)
    epsb_p = _pad2(eps_b.reshape(1, -1), 1, n_pad)

    pmu_s = prior_mu.reshape(1, 1)
    plv_s = prior_logvar.reshape(1, 1)
    inv2v_s = 0.5 * jnp.exp(-plv_s)   # precompute: no scalar exp in-kernel

    grid = (m_pad // tm, n_pad // tn, k_pad // tk)

    kernel = partial(
        _fused_hbl_kernel,
        out_features=out_features, in_features=in_features,
        tn=tn, tk=tk,
        mask_w=(n_pad != out_features) or (k_pad != in_features),
        mask_b=(n_pad != out_features))

    smem_spec = pl.BlockSpec(memory_space=pltpu.MemorySpace.SMEM)

    y_pad, kl2d = pl.pallas_call(
        kernel,
        out_shape=(jax.ShapeDtypeStruct((m_pad, n_pad), jnp.float32),
                   jax.ShapeDtypeStruct((1, 1), jnp.float32)),
        grid=grid,
        in_specs=[
            pl.BlockSpec((tm, tk), lambda i, j, k: (i, k)),   # x
            pl.BlockSpec((tn, tk), lambda i, j, k: (j, k)),   # weight_mu
            pl.BlockSpec((tn, tk), lambda i, j, k: (j, k)),   # weight_rho
            pl.BlockSpec((tn, tk), lambda i, j, k: (j, k)),   # eps_w
            pl.BlockSpec((1, tn), lambda i, j, k: (0, j)),    # bias_mu
            pl.BlockSpec((1, tn), lambda i, j, k: (0, j)),    # bias_rho
            pl.BlockSpec((1, tn), lambda i, j, k: (0, j)),    # eps_b
            smem_spec,                                        # prior_mu
            smem_spec,                                        # prior_logvar
            smem_spec,                                        # 0.5*exp(-logvar)
        ],
        out_specs=[
            pl.BlockSpec((tm, tn), lambda i, j, k: (i, j)),   # y
            pl.BlockSpec((1, 1), lambda i, j, k: (0, 0)),     # kl
        ],
        scratch_shapes=[pltpu.VMEM((tm, tn), jnp.float32),    # matmul acc
                        pltpu.VMEM((1, 1), jnp.float32)],     # kl acc
        compiler_params=pltpu.CompilerParams(
            dimension_semantics=("arbitrary", "arbitrary", "arbitrary"),
            vmem_limit_bytes=32 * 1024 * 1024),
    )(x_p, wmu_p, wrho_p, epsw_p, bmu_p, brho_p, epsb_p, pmu_s, plv_s, inv2v_s)

    y = y_pad[:batch, :out_features]
    return y, kl2d.reshape(1)   # kl has shape (1,), like the PyTorch module


# ---------------------------------------------------------------------------
# Deterministic parameter initialization (mirrors reset_parameters)
# ---------------------------------------------------------------------------
def init_params(key, in_features, out_features):
    k_w, k_b = jax.random.split(key)
    # kaiming_uniform_(a=sqrt(5)) on (out, in): bound = 1/sqrt(fan_in)
    bound_w = 1.0 / np.sqrt(in_features)
    weight_mu = jax.random.uniform(
        k_w, (out_features, in_features), jnp.float32, -bound_w, bound_w)
    weight_rho = jnp.full((out_features, in_features), -5.0, jnp.float32)
    bias_mu = jax.random.uniform(k_b, (out_features,), jnp.float32, -0.1, 0.1)
    bias_rho = jnp.full((out_features,), -5.0, jnp.float32)
    prior_mu = jnp.zeros((1,), jnp.float32)
    prior_logvar = jnp.zeros((1,), jnp.float32)
    return dict(weight_mu=weight_mu, weight_rho=weight_rho,
                bias_mu=bias_mu, bias_rho=bias_rho,
                prior_mu=prior_mu, prior_logvar=prior_logvar)


if __name__ == "__main__":
    in_features, out_features, batch = 32, 16, 8

    root = jax.random.PRNGKey(0)
    k_param, k_x, k_noise = jax.random.split(root, 3)

    params = init_params(k_param, in_features, out_features)
    x = jax.random.normal(k_x, (batch, in_features), dtype=jnp.float32)

    y, kl = hierarchical_bayesian_linear_forward(x, params, k_noise)
    jax.block_until_ready((y, kl))

    # ---- pure-JAX reference with the SAME eps draws -------------------------
    k_w, k_b = jax.random.split(k_noise)
    eps_w = jax.random.normal(k_w, (out_features, in_features), jnp.float32)
    eps_b = jax.random.normal(k_b, (out_features,), jnp.float32)
    w_sigma = jnp.log1p(jnp.exp(params["weight_rho"]))
    b_sigma = jnp.log1p(jnp.exp(params["bias_rho"]))
    w_s = params["weight_mu"] + w_sigma * eps_w
    b_s = params["bias_mu"] + b_sigma * eps_b
    y_ref = jnp.dot(x, w_s.T, precision=jax.lax.Precision.HIGHEST) + b_s

    pmu = params["prior_mu"][0]
    plv = params["prior_logvar"][0]
    pvar = jnp.exp(plv)

    def kl_sum(mu, sigma):
        return jnp.sum(jnp.log(jnp.sqrt(pvar) / sigma)
                       + (sigma ** 2 + (mu - pmu) ** 2) / (2.0 * pvar) - 0.5)

    kl_ref = (kl_sum(params["weight_mu"], w_sigma)
              + kl_sum(params["bias_mu"], b_sigma)
              + 0.5 * pmu ** 2 + 0.5 * plv ** 2)

    assert y.shape == (batch, out_features) and y.dtype == jnp.float32
    assert kl.shape == (1,) and kl.dtype == jnp.float32
    assert bool(jnp.all(jnp.isfinite(y))) and bool(jnp.all(jnp.isfinite(kl)))
    np.testing.assert_allclose(np.asarray(y), np.asarray(y_ref),
                               rtol=5e-3, atol=5e-3)
    np.testing.assert_allclose(float(kl[0]), float(kl_ref),
                               rtol=5e-3, atol=5e-3)

    print("KERNEL_OK")
</pallas_src>

<mosaic_0001>
module attributes {stable_mosaic.version = 11 : i64} {
  func.func @_fused_hbl_kernel(%arg0: i32, %arg1: i32, %arg2: i32, %arg3: memref<8x128xf32, #tpu.memory_space<vmem>>, %arg4: memref<128x128xf32, #tpu.memory_space<vmem>>, %arg5: memref<128x128xf32, #tpu.memory_space<vmem>>, %arg6: memref<128x128xf32, #tpu.memory_space<vmem>>, %arg7: memref<1x128xf32, #tpu.memory_space<vmem>>, %arg8: memref<1x128xf32, #tpu.memory_space<vmem>>, %arg9: memref<1x128xf32, #tpu.memory_space<vmem>>, %arg10: memref<1x1xf32, #tpu.memory_space<smem>>, %arg11: memref<1x1xf32, #tpu.memory_space<smem>>, %arg12: memref<1x1xf32, #tpu.memory_space<smem>>, %arg13: memref<8x128xf32, #tpu.memory_space<vmem>>, %arg14: memref<1x1xf32, #tpu.memory_space<vmem>>, %arg15: memref<8x128xf32, #tpu.memory_space<vmem>>, %arg16: memref<1x1xf32, #tpu.memory_space<vmem>>) attributes {dimension_semantics = [#tpu.dimension_semantics<arbitrary>, #tpu.dimension_semantics<arbitrary>, #tpu.dimension_semantics<arbitrary>], iteration_bounds = array<i64: 1, 1, 1>, scalar_prefetch = 0 : i64, scratch_operands = 2 : i64, tpu.core_type = #tpu.core_type<tc>, window_params = [{transform_indices = @transform_0, window_bounds = array<i64: 8, 128>}, {transform_indices = @transform_1, window_bounds = array<i64: 128, 128>}, {transform_indices = @transform_2, window_bounds = array<i64: 128, 128>}, {transform_indices = @transform_3, window_bounds = array<i64: 128, 128>}, {transform_indices = @transform_4, window_bounds = array<i64: 1, 128>}, {transform_indices = @transform_5, window_bounds = array<i64: 1, 128>}, {transform_indices = @transform_6, window_bounds = array<i64: 1, 128>}, {transform_indices = @transform_7, window_bounds = array<i64: 1, 1>}, {transform_indices = @transform_8, window_bounds = array<i64: 1, 1>}, {transform_indices = @transform_9, window_bounds = array<i64: 1, 1>}, {transform_indices = @transform_10, window_bounds = array<i64: 8, 128>}, {pipeline_mode = #tpu.pipeline_mode<synchronous>, transform_indices = @transform_11, window_bounds = array<i64: 1, 1>}]} {
    %c0 = arith.constant 0 : index
    %c0_0 = arith.constant 0 : index
    %0 = memref.load %arg10[%c0, %c0_0] : memref<1x1xf32, #tpu.memory_space<smem>>
    %c0_1 = arith.constant 0 : index
    %c0_2 = arith.constant 0 : index
    %1 = memref.load %arg11[%c0_1, %c0_2] : memref<1x1xf32, #tpu.memory_space<smem>>
    %c0_3 = arith.constant 0 : index
    %c0_4 = arith.constant 0 : index
    %2 = memref.load %arg12[%c0_3, %c0_4] : memref<1x1xf32, #tpu.memory_space<smem>>
    %cst = arith.constant 5.000000e-01 : f32
    %3 = arith.mulf %cst, %1 : f32
    %c0_i32 = arith.constant 0 : i32
    %4 = arith.cmpi eq, %arg0, %c0_i32 : i32
    %c0_i32_5 = arith.constant 0 : i32
    %5 = arith.cmpi eq, %arg1, %c0_i32_5 : i32
    %6 = arith.andi %4, %5 : i1
    %c0_i32_6 = arith.constant 0 : i32
    %7 = arith.cmpi eq, %arg2, %c0_i32_6 : i32
    %8 = arith.andi %6, %7 : i1
    %9 = arith.extui %8 : i1 to i32
    %c0_i32_7 = arith.constant 0 : i32
    %10 = arith.cmpi ne, %9, %c0_i32_7 : i32
    scf.if %10 {
      %cst_42 = arith.constant 0.000000e+00 : f32
      %58 = vector.broadcast %cst_42 : f32 to vector<1x1xf32>
      %c0_43 = arith.constant 0 : index
      %c0_44 = arith.constant 0 : index
      %59 = vector.load %arg16[%c0_43, %c0_44] : memref<1x1xf32, #tpu.memory_space<vmem>>, vector<1x1xf32>
      tpu.vector_store %arg16[%c0_43, %c0_44], %58 {strides = array<i32>} : memref<1x1xf32, #tpu.memory_space<vmem>>, vector<1x1xf32>,
    } else {
    }
    %c0_i32_8 = arith.constant 0 : i32
    %11 = arith.cmpi eq, %arg2, %c0_i32_8 : i32
    %12 = arith.extui %11 : i1 to i32
    %c0_i32_9 = arith.constant 0 : i32
    %13 = arith.cmpi ne, %12, %c0_i32_9 : i32
    scf.if %13 {
      %cst_42 = arith.constant 0.000000e+00 : f32
      %58 = vector.broadcast %cst_42 : f32 to vector<8x128xf32>
      %c0_43 = arith.constant 0 : index
      %c0_44 = arith.constant 0 : index
      %59 = vector.load %arg15[%c0_43, %c0_44] : memref<8x128xf32, #tpu.memory_space<vmem>>, vector<8x128xf32>
      tpu.vector_store %arg15[%c0_43, %c0_44], %58 {strides = array<i32>} : memref<8x128xf32, #tpu.memory_space<vmem>>, vector<8x128xf32>,
    } else {
    }
    %c0_10 = arith.constant 0 : index
    %c0_11 = arith.constant 0 : index
    %14 = vector.load %arg4[%c0_10, %c0_11] : memref<128x128xf32, #tpu.memory_space<vmem>>, vector<128x128xf32>
    %c0_12 = arith.constant 0 : index
    %c0_13 = arith.constant 0 : index
    %15 = vector.load %arg5[%c0_12, %c0_13] : memref<128x128xf32, #tpu.memory_space<vmem>>, vector<128x128xf32>
    %cst_14 = arith.constant 2.000000e+01 : f32
    %16 = vector.broadcast %cst_14 : f32 to vector<128x128xf32>
    %17 = arith.cmpf ogt, %15, %16 : vector<128x128xf32>
    %cst_15 = arith.constant 2.000000e+01 : f32
    %18 = vector.broadcast %cst_15 : f32 to vector<128x128xf32>
    %19 = arith.minimumf %15, %18 : vector<128x128xf32>
    %20 = math.exp %19 : vector<128x128xf32>
    %21 = math.log1p %20 : vector<128x128xf32>
    %22 = arith.select %17, %15, %21 : vector<128x128xi1>, vector<128x128xf32>
    %c0_16 = arith.constant 0 : index
    %c0_17 = arith.constant 0 : index
    %23 = vector.load %arg6[%c0_16, %c0_17] : memref<128x128xf32, #tpu.memory_space<vmem>>, vector<128x128xf32>
    %24 = arith.mulf %22, %23 : vector<128x128xf32>
    %25 = arith.addf %14, %24 : vector<128x128xf32>
    %c0_18 = arith.constant 0 : index
    %c0_19 = arith.constant 0 : index
    %26 = vector.load %arg15[%c0_18, %c0_19] : memref<8x128xf32, #tpu.memory_space<vmem>>, vector<8x128xf32>
    %c0_20 = arith.constant 0 : index
    %c0_21 = arith.constant 0 : index
    %27 = vector.load %arg3[%c0_20, %c0_21] : memref<8x128xf32, #tpu.memory_space<vmem>>, vector<8x128xf32>
    %cst_22 = arith.constant dense<0.000000e+00> : vector<8x128xf32>
    %28 = tpu.matmul %27, %25, %cst_22 {dimension_numbers = #tpu.dot_dimension_numbers<[1], [1], [0], [0], [0, 0, 1, 0], [], []>} : vector<8x128xf32>, vector<128x128xf32>, vector<8x128xf32> -> vector<8x128xf32>
    %29 = arith.addf %26, %28 : vector<8x128xf32>
    %c0_23 = arith.constant 0 : index
    %c0_24 = arith.constant 0 : index
    %30 = vector.load %arg15[%c0_23, %c0_24] : memref<8x128xf32, #tpu.memory_space<vmem>>, vector<8x128xf32>
    tpu.vector_store %arg15[%c0_23, %c0_24], %29 {strides = array<i32>} : memref<8x128xf32, #tpu.memory_space<vmem>>, vector<8x128xf32>,
    %c0_i32_25 = arith.constant 0 : i32
    %31 = arith.cmpi eq, %arg0, %c0_i32_25 : i32
    %32 = arith.extui %31 : i1 to i32
    %c0_i32_26 = arith.constant 0 : i32
    %33 = arith.cmpi ne, %32, %c0_i32_26 : i32
    scf.if %33 {
      %58 = math.log %22 : vector<128x128xf32>
      %59 = vector.broadcast %3 : f32 to vector<128x128xf32>
      %60 = arith.subf %59, %58 : vector<128x128xf32>
      %61 = arith.mulf %22, %22 : vector<128x128xf32>
      %62 = vector.broadcast %0 : f32 to vector<128x128xf32>
      %63 = arith.subf %14, %62 : vector<128x128xf32>
      %64 = arith.mulf %63, %63 : vector<128x128xf32>
      %65 = arith.addf %61, %64 : vector<128x128xf32>
      %66 = vector.broadcast %2 : f32 to vector<128x128xf32>
      %67 = arith.mulf %65, %66 : vector<128x128xf32>
      %68 = arith.addf %60, %67 : vector<128x128xf32>
      %cst_42 = arith.constant 5.000000e-01 : f32
      %69 = vector.broadcast %cst_42 : f32 to vector<128x128xf32>
      %70 = arith.subf %68, %69 : vector<128x128xf32>
      %71 = tpu.iota {dimensions = array<i32: 0>} : vector<128x128xi32>
      %c128_i32 = arith.constant 128 : i32
      %72 = arith.muli %arg1, %c128_i32 : i32
      %73 = vector.broadcast %72 : i32 to vector<128x128xi32>
      %74 = arith.addi %71, %73 : vector<128x128xi32>
      %75 = tpu.iota {dimensions = array<i32: 1>} : vector<128x128xi32>
      %c128_i32_43 = arith.constant 128 : i32
      %76 = arith.muli %arg2, %c128_i32_43 : i32
      %77 = vector.broadcast %76 : i32 to vector<128x128xi32>
      %78 = arith.addi %75, %77 : vector<128x128xi32>
      %c16_i32 = arith.constant 16 : i32
      %79 = vector.broadcast %c16_i32 : i32 to vector<128x128xi32>
      %80 = arith.cmpi slt, %74, %79 : vector<128x128xi32>
      %c32_i32 = arith.constant 32 : i32
      %81 = vector.broadcast %c32_i32 : i32 to vector<128x128xi32>
      %82 = arith.cmpi slt, %78, %81 : vector<128x128xi32>
      %83 = arith.andi %80, %82 : vector<128x128xi1>
      %cst_44 = arith.constant 0.000000e+00 : f32
      %84 = vector.broadcast %cst_44 : f32 to vector<128x128xf32>
      %85 = arith.select %83, %70, %84 : vector<128x128xi1>, vector<128x128xf32>
      %c0_45 = arith.constant 0 : index
      %c0_46 = arith.constant 0 : index
      %86 = vector.load %arg16[%c0_45, %c0_46] : memref<1x1xf32, #tpu.memory_space<vmem>>, vector<1x1xf32>
      %87 = vector.shape_cast %85 : vector<128x128xf32> to vector<1x128x128xf32>
      %cst_47 = arith.constant dense<0.000000e+00> : vector<1xf32>
      %88 = vector.multi_reduction <add>, %87, %cst_47 [1, 2] : vector<1x128x128xf32> to vector<1xf32>
      %89 = vector.shape_cast %88 : vector<1xf32> to vector<1x1x1xf32>
      %90 = vector.extract %89[0, 0, 0] : f32 from vector<1x1x1xf32>
      %91 = vector.broadcast %90 : f32 to vector<1x1xf32>
      %92 = arith.addf %86, %91 : vector<1x1xf32>
      %c0_48 = arith.constant 0 : index
      %c0_49 = arith.constant 0 : index
      %93 = vector.load %arg16[%c0_48, %c0_49] : memref<1x1xf32, #tpu.memory_space<vmem>>, vector<1x1xf32>
      tpu.vector_store %arg16[%c0_48, %c0_49], %92 {strides = array<i32>} : memref<1x1xf32, #tpu.memory_space<vmem>>, vector<1x1xf32>,
    } else {
    }
    %c0_27 = arith.constant 0 : index
    %c0_28 = arith.constant 0 : index
    %34 = vector.load %arg7[%c0_27, %c0_28] : memref<1x128xf32, #tpu.memory_space<vmem>>, vector<1x128xf32>
    %c0_29 = arith.constant 0 : index
    %c0_30 = arith.constant 0 : index
    %35 = vector.load %arg8[%c0_29, %c0_30] : memref<1x128xf32, #tpu.memory_space<vmem>>, vector<1x128xf32>
    %cst_31 = arith.constant 2.000000e+01 : f32
    %36 = vector.broadcast %cst_31 : f32 to vector<1x128xf32>
    %37 = arith.cmpf ogt, %35, %36 : vector<1x128xf32>
    %cst_32 = arith.constant 2.000000e+01 : f32
    %38 = vector.broadcast %cst_32 : f32 to vector<1x128xf32>
    %39 = arith.minimumf %35, %38 : vector<1x128xf32>
    %40 = math.exp %39 : vector<1x128xf32>
    %41 = math.log1p %40 : vector<1x128xf32>
    %42 = arith.select %37, %35, %41 : vector<1x128xi1>, vector<1x128xf32>
    %c0_i32_33 = arith.constant 0 : i32
    %43 = arith.cmpi eq, %arg0, %c0_i32_33 : i32
    %c0_i32_34 = arith.constant 0 : i32
    %44 = arith.cmpi eq, %arg2, %c0_i32_34 : i32
    %45 = arith.andi %43, %44 : i1
    %46 = arith.extui %45 : i1 to i32
    %c0_i32_35 = arith.constant 0 : i32
    %47 = arith.cmpi ne, %46, %c0_i32_35 : i32
    scf.if %47 {
      %58 = math.log %42 : vector<1x128xf32>
      %59 = vector.broadcast %3 : f32 to vector<1x128xf32>
      %60 = arith.subf %59, %58 : vector<1x128xf32>
      %61 = arith.mulf %42, %42 : vector<1x128xf32>
      %62 = vector.broadcast %0 : f32 to vector<1x128xf32>
      %63 = arith.subf %34, %62 : vector<1x128xf32>
      %64 = arith.mulf %63, %63 : vector<1x128xf32>
      %65 = arith.addf %61, %64 : vector<1x128xf32>
      %66 = vector.broadcast %2 : f32 to vector<1x128xf32>
      %67 = arith.mulf %65, %66 : vector<1x128xf32>
      %68 = arith.addf %60, %67 : vector<1x128xf32>
      %cst_42 = arith.constant 5.000000e-01 : f32
      %69 = vector.broadcast %cst_42 : f32 to vector<1x128xf32>
      %70 = arith.subf %68, %69 : vector<1x128xf32>
      %71 = tpu.iota {dimensions = array<i32: 1>} : vector<1x128xi32>
      %c128_i32 = arith.constant 128 : i32
      %72 = arith.muli %arg1, %c128_i32 : i32
      %73 = vector.broadcast %72 : i32 to vector<1x128xi32>
      %74 = arith.addi %71, %73 : vector<1x128xi32>
      %c16_i32 = arith.constant 16 : i32
      %75 = vector.broadcast %c16_i32 : i32 to vector<1x128xi32>
      %76 = arith.cmpi slt, %74, %75 : vector<1x128xi32>
      %cst_43 = arith.constant 0.000000e+00 : f32
      %77 = vector.broadcast %cst_43 : f32 to vector<1x128xf32>
      %78 = arith.select %76, %70, %77 : vector<1x128xi1>, vector<1x128xf32>
      %c0_44 = arith.constant 0 : index
      %c0_45 = arith.constant 0 : index
      %79 = vector.load %arg16[%c0_44, %c0_45] : memref<1x1xf32, #tpu.memory_space<vmem>>, vector<1x1xf32>
      %80 = vector.shape_cast %78 : vector<1x128xf32> to vector<1x1x128xf32>
      %cst_46 = arith.constant dense<0.000000e+00> : vector<1xf32>
      %81 = vector.multi_reduction <add>, %80, %cst_46 [1, 2] : vector<1x1x128xf32> to vector<1xf32>
      %82 = vector.shape_cast %81 : vector<1xf32> to vector<1x1x1xf32>
      %83 = vector.extract %82[0, 0, 0] : f32 from vector<1x1x1xf32>
      %84 = vector.broadcast %83 : f32 to vector<1x1xf32>
      %85 = arith.addf %79, %84 : vector<1x1xf32>
      %c0_47 = arith.constant 0 : index
      %c0_48 = arith.constant 0 : index
      %86 = vector.load %arg16[%c0_47, %c0_48] : memref<1x1xf32, #tpu.memory_space<vmem>>, vector<1x1xf32>
      tpu.vector_store %arg16[%c0_47, %c0_48], %85 {strides = array<i32>} : memref<1x1xf32, #tpu.memory_space<vmem>>, vector<1x1xf32>,
    } else {
    }
    %c0_i32_36 = arith.constant 0 : i32
    %48 = arith.cmpi eq, %arg2, %c0_i32_36 : i32
    %49 = arith.extui %48 : i1 to i32
    %c0_i32_37 = arith.constant 0 : i32
    %50 = arith.cmpi ne, %49, %c0_i32_37 : i32
    scf.if %50 {
      %c0_42 = arith.constant 0 : index
      %c0_43 = arith.constant 0 : index
      %58 = vector.load %arg9[%c0_42, %c0_43] : memref<1x128xf32, #tpu.memory_space<vmem>>, vector<1x128xf32>
      %59 = arith.mulf %42, %58 : vector<1x128xf32>
      %60 = arith.addf %34, %59 : vector<1x128xf32>
      %c0_44 = arith.constant 0 : index
      %c0_45 = arith.constant 0 : index
      %61 = vector.load %arg15[%c0_44, %c0_45] : memref<8x128xf32, #tpu.memory_space<vmem>>, vector<8x128xf32>
      %62 = vector.broadcast %60 : vector<1x128xf32> to vector<8x128xf32>
      %63 = arith.addf %61, %62 : vector<8x128xf32>
      %c0_46 = arith.constant 0 : index
      %c0_47 = arith.constant 0 : index
      %64 = vector.load %arg13[%c0_46, %c0_47] : memref<8x128xf32, #tpu.memory_space<vmem>>, vector<8x128xf32>
      tpu.vector_store %arg13[%c0_46, %c0_47], %63 {strides = array<i32>} : memref<8x128xf32, #tpu.memory_space<vmem>>, vector<8x128xf32>,
    } else {
    }
    %c0_i32_38 = arith.constant 0 : i32
    %51 = arith.cmpi eq, %arg0, %c0_i32_38 : i32
    %c0_i32_39 = arith.constant 0 : i32
    %52 = arith.cmpi eq, %arg1, %c0_i32_39 : i32
    %53 = arith.andi %51, %52 : i1
    %c0_i32_40 = arith.constant 0 : i32
    %54 = arith.cmpi eq, %arg2, %c0_i32_40 : i32
    %55 = arith.andi %53, %54 : i1
    %56 = arith.extui %55 : i1 to i32
    %c0_i32_41 = arith.constant 0 : i32
    %57 = arith.cmpi ne, %56, %c0_i32_41 : i32
    scf.if %57 {
      %c0_42 = arith.constant 0 : index
      %c0_43 = arith.constant 0 : index
      %58 = vector.load %arg16[%c0_42, %c0_43] : memref<1x1xf32, #tpu.memory_space<vmem>>, vector<1x1xf32>
      %cst_44 = arith.constant 5.000000e-01 : f32
      %59 = arith.mulf %cst_44, %0 : f32
      %60 = arith.mulf %59, %0 : f32
      %61 = vector.broadcast %60 : f32 to vector<1x1xf32>
      %62 = arith.addf %58, %61 : vector<1x1xf32>
      %cst_45 = arith.constant 5.000000e-01 : f32
      %63 = arith.mulf %cst_45, %1 : f32
      %64 = arith.mulf %63, %1 : f32
      %65 = vector.broadcast %64 : f32 to vector<1x1xf32>
      %66 = arith.addf %62, %65 : vector<1x1xf32>
      %c0_46 = arith.constant 0 : index
      %c0_47 = arith.constant 0 : index
      %67 = vector.load %arg14[%c0_46, %c0_47] : memref<1x1xf32, #tpu.memory_space<vmem>>, vector<1x1xf32>
      tpu.vector_store %arg14[%c0_46, %c0_47], %66 {strides = array<i32>} : memref<1x1xf32, #tpu.memory_space<vmem>>, vector<1x1xf32>,
    } else {
    }
    return
  }
  func.func @transform_0(%arg0: i32, %arg1: i32, %arg2: i32) -> (i32, i32) {
    %c0_i32 = arith.constant 0 : i32
    return %arg0, %arg2 : i32, i32
  }
  func.func @transform_1(%arg0: i32, %arg1: i32, %arg2: i32) -> (i32, i32) {
    %c0_i32 = arith.constant 0 : i32
    return %arg1, %arg2 : i32, i32
  }
  func.func @transform_2(%arg0: i32, %arg1: i32, %arg2: i32) -> (i32, i32) {
    %c0_i32 = arith.constant 0 : i32
    return %arg1, %arg2 : i32, i32
  }
  func.func @transform_3(%arg0: i32, %arg1: i32, %arg2: i32) -> (i32, i32) {
    %c0_i32 = arith.constant 0 : i32
    return %arg1, %arg2 : i32, i32
  }
  func.func @transform_4(%arg0: i32, %arg1: i32, %arg2: i32) -> (i32, i32) {
    %c0_i32 = arith.constant 0 : i32
    %c0_i32_0 = arith.constant 0 : i32
    return %c0_i32, %arg1 : i32, i32
  }
  func.func @transform_5(%arg0: i32, %arg1: i32, %arg2: i32) -> (i32, i32) {
    %c0_i32 = arith.constant 0 : i32
    %c0_i32_0 = arith.constant 0 : i32
    return %c0_i32, %arg1 : i32, i32
  }
  func.func @transform_6(%arg0: i32, %arg1: i32, %arg2: i32) -> (i32, i32) {
    %c0_i32 = arith.constant 0 : i32
    %c0_i32_0 = arith.constant 0 : i32
    return %c0_i32, %arg1 : i32, i32
  }
  func.func @transform_7(%arg0: i32, %arg1: i32, %arg2: i32) -> (i32, i32) {
    %c0_i32 = arith.constant 0 : i32
    %c0_i32_0 = arith.constant 0 : i32
    %c0_i32_1 = arith.constant 0 : i32
    return %c0_i32, %c0_i32_0 : i32, i32
  }
  func.func @transform_8(%arg0: i32, %arg1: i32, %arg2: i32) -> (i32, i32) {
    %c0_i32 = arith.constant 0 : i32
    %c0_i32_0 = arith.constant 0 : i32
    %c0_i32_1 = arith.constant 0 : i32
    return %c0_i32, %c0_i32_0 : i32, i32
  }
  func.func @transform_9(%arg0: i32, %arg1: i32, %arg2: i32) -> (i32, i32) {
    %c0_i32 = arith.constant 0 : i32
    %c0_i32_0 = arith.constant 0 : i32
    %c0_i32_1 = arith.constant 0 : i32
    return %c0_i32, %c0_i32_0 : i32, i32
  }
  func.func @transform_10(%arg0: i32, %arg1: i32, %arg2: i32) -> (i32, i32) {
    %c0_i32 = arith.constant 0 : i32
    return %arg0, %arg1 : i32, i32
  }
  func.func @transform_11(%arg0: i32, %arg1: i32, %arg2: i32) -> (i32, i32) {
    %c0_i32 = arith.constant 0 : i32
    %c0_i32_0 = arith.constant 0 : i32
    %c0_i32_1 = arith.constant 0 : i32
    return %c0_i32, %c0_i32_0 : i32, i32
  }
}

</mosaic_0001>

<llo_original>
// kernel: tpu_custom_call.1
$region0: #{tpu_custom_call.1}
  #allocation0 [shape = 'u32[]', space=smem, size = 0x4, offset = 0x4, fixed_abs, tag = 'smem constant byte address 0x4 - core index']
  #allocation1 [shape = 'u32[144,128]{1,0:T(1,128)}', space=vmem, size = 0x12000, scoped, tag = 'internal scratch']
  #allocation2 [shape = 'f32[8,128]{1,0:T(8,128)}', space=vmem, size = 0x1000, scoped, tag = 'scratch operand']
  #allocation3 [shape = 'f32[1,1]{1,0:T(1,128)}', space=vmem, size = 0x200, scoped, tag = 'scratch operand']
  #allocation4 [shape = 'f32[1,1]{1,0:T(1,128)S(6)}', space=smem, size = 0x200, scoped, tag = 'scoped memory for tpu_custom_call.1']
  #allocation5 [shape = 'f32[1,1]{1,0:T(1,128)S(6)}', space=smem, size = 0x200, scoped, tag = 'scoped memory for tpu_custom_call.1']
  #allocation6 [shape = 'f32[1,1]{1,0:T(1,128)S(6)}', space=smem, size = 0x200, scoped, tag = 'scoped memory for tpu_custom_call.1']
  %s0 = inlined_call_operand.hbm [shape: f32[8,128], index: 0, kind: input, shape index: {}]
  %s1 = inlined_call_operand.hbm [shape: f32[128,128], index: 1, kind: input, shape index: {}]
  %s2 = inlined_call_operand.hbm [shape: f32[128,128], index: 2, kind: input, shape index: {}]
  %s3 = inlined_call_operand.hbm [shape: f32[128,128], index: 3, kind: input, shape index: {}]
  %s4 = inlined_call_operand.vmem [shape: f32[1,128], index: 4, kind: input, shape index: {}]
  %s5 = inlined_call_operand.vmem [shape: f32[1,128], index: 5, kind: input, shape index: {}]
  %s6 = inlined_call_operand.vmem [shape: f32[1,128], index: 6, kind: input, shape index: {}]
  %s7 = inlined_call_operand.<no memory space> [shape: f32[1,1], index: 7, kind: input, shape index: {}]
  %s8 = inlined_call_operand.<no memory space> [shape: f32[1,1], index: 8, kind: input, shape index: {}]
  %s9 = inlined_call_operand.<no memory space> [shape: f32[1,1], index: 9, kind: input, shape index: {}]
  %s10 = inlined_call_operand.hbm [shape: f32[8,128], index: 10, kind: output, shape index: {0}]
  %s11 = inlined_call_operand.hbm [shape: f32[1,1], index: 11, kind: output, shape index: {1}]
  %12 = xla_tuple %s10, %s11
  %s13 = sld [smem:[#allocation0]]
  $region98: #{tpu_custom_call.1} parent=0
    _
  %s15 = ssub.s32 1, %s13
  %s16 = scalar_select 0, %s15, %s13
  %17 = sst [smem:[#allocation4]] %s7
  %18 = sst [smem:[#allocation5]] %s8
  %19 = sst [smem:[#allocation6]] %s9
  $region1: #{tpu_custom_call.1} parent=0
    #allocation7 [shape = 'u8[4096]{0}', space=vmem, size = 0x1000, scoped, tag = 'input window, operand 0, single buffered']
    #allocation8 [shape = 's32[1]{0}', space=sflag, size = 0x4, scoped, tag = 'scoped memory for tpu_custom_call.1']
    #allocation9 [shape = 's32[1]{0}', space=sflag, size = 0x4, scoped, tag = 'scoped memory for tpu_custom_call.1']
    #allocation10 [shape = 'u8[65536]{0}', space=vmem, size = 0x10000, scoped, tag = 'input window, operand 1, single buffered']
    #allocation11 [shape = 's32[1]{0}', space=sflag, size = 0x4, scoped, tag = 'scoped memory for tpu_custom_call.1']
    #allocation12 [shape = 'u8[65536]{0}', space=vmem, size = 0x10000, scoped, tag = 'input window, operand 2, single buffered']
    #allocation13 [shape = 'u8[65536]{0}', space=vmem, size = 0x10000, scoped, tag = 'input window, operand 3, single buffered']
    #allocation14 [shape = 's32[1]{0}', space=sflag, size = 0x4, scoped, tag = 'scoped memory for tpu_custom_call.1']
    #allocation15 [shape = 'u8[4096]{0}', space=vmem, size = 0x1000, scoped, tag = 'output window, operand 0, single buffered']
    #allocation16 [shape = 'u8[512]{0}', space=vmem, size = 0x400, scoped, tag = 'output window, operand 1, single buffered']
    #allocation17 [shape = 's32[1]{0}', space=sflag, size = 0x4, scoped, tag = 'scoped memory for tpu_custom_call.1']
    %20 = vsyncpa [#allocation8], 0
    %21 = vsyncpa [#allocation11], 0
    %22 = vsyncpa [#allocation14], 0
    %23 = vsyncpa [#allocation9], 0
    %24 = vsyncpa [#allocation17], 0
    // Predicated region
    $region2: #{tpu_custom_call.1} parent=1 // pred_check
      _
    $region3: #{tpu_custom_call.1} parent=1 // pred_check_branch
      %26 = sbr.rel (0) target = $region5
    $region4: #{tpu_custom_call.1} parent=1 // pred_region
      %s28 = ssub.s32 128, 128
      %29 = vsyncadd [#allocation8], %s28
      %s31 = sshll.u32 [#allocation7], 4
      %s32 = int_to_ptr.vmem [resolvable:$true] %s31
      %34 = dma.hbm_to_vmem [thread:$0]  %s0, 128, %s32, [#allocation8]
    $region5: #{tpu_custom_call.1} parent=1 // pred_fallthru
      _
    // Predicated region
    $region6: #{tpu_custom_call.1} parent=1 // pred_check
      _
    $region7: #{tpu_custom_call.1} parent=1 // pred_check_branch
      %36 = sbr.rel (0) target = $region9
    $region8: #{tpu_custom_call.1} parent=1 // pred_region
      %s38 = ssub.s32 2048, 2048
      %39 = vsyncadd [#allocation11], %s38
      %s40 = sshll.u32 [#allocation10], 4
      %s41 = int_to_ptr.vmem [resolvable:$true] %s40
      %46 = dma.hbm_to_vmem [thread:$0]  %s1, 2048, %s41, [#allocation11], 128, 128, 8
    $region9: #{tpu_custom_call.1} parent=1 // pred_fallthru
      _
    // Predicated region
    $region10: #{tpu_custom_call.1} parent=1 // pred_check
      _
    $region11: #{tpu_custom_call.1} parent=1 // pred_check_branch
      %48 = sbr.rel (0) target = $region13
    $region12: #{tpu_custom_call.1} parent=1 // pred_region
      %s50 = ssub.s32 2048, 2048
      %51 = vsyncadd [#allocation11], %s50
      %s52 = sshll.u32 [#allocation12], 4
      %s53 = int_to_ptr.vmem [resolvable:$true] %s52
      %58 = dma.hbm_to_vmem [thread:$0]  %s2, 2048, %s53, [#allocation11], 128, 128, 8
    $region13: #{tpu_custom_call.1} parent=1 // pred_fallthru
      _
    // Predicated region
    $region14: #{tpu_custom_call.1} parent=1 // pred_check
      _
    $region15: #{tpu_custom_call.1} parent=1 // pred_check_branch
      %60 = sbr.rel (0) target = $region17
    $region16: #{tpu_custom_call.1} parent=1 // pred_region
      %s62 = ssub.s32 2048, 2048
      %63 = vsyncadd [#allocation14], %s62
      %s64 = sshll.u32 [#allocation13], 4
      %s65 = int_to_ptr.vmem [resolvable:$true] %s64
      %70 = dma.hbm_to_vmem [thread:$0]  %s3, 2048, %s65, [#allocation14], 128, 128, 8
    $region17: #{tpu_custom_call.1} parent=1 // pred_fallthru
      _
    // Predicated region
    $region18: #{tpu_custom_call.1} parent=1 // pred_check
      _
    $region19: #{tpu_custom_call.1} parent=1 // pred_check_branch
      %72 = sbr.rel (0) target = $region21
    $region20: #{tpu_custom_call.1} parent=1 // pred_region
      _
    $region21: #{tpu_custom_call.1} parent=1 // pred_fallthru
      _
    // Predicated region
    $region22: #{tpu_custom_call.1} parent=1 // pred_check
      _
    $region23: #{tpu_custom_call.1} parent=1 // pred_check_branch
      %74 = sbr.rel (0) target = $region25
    $region24: #{tpu_custom_call.1} parent=1 // pred_region
      _
    $region25: #{tpu_custom_call.1} parent=1 // pred_fallthru
      _
    // Predicated region
    $region26: #{tpu_custom_call.1} parent=1 // pred_check
      _
    $region27: #{tpu_custom_call.1} parent=1 // pred_check_branch
      %76 = sbr.rel (0) target = $region29
    $region28: #{tpu_custom_call.1} parent=1 // pred_region
      _
    $region29: #{tpu_custom_call.1} parent=1 // pred_fallthru
      _
    // Predicated region
    $region30: #{tpu_custom_call.1} parent=1 // pred_check
      _
    $region31: #{tpu_custom_call.1} parent=1 // pred_check_branch
      %78 = sbr.rel (0) target = $region33
    $region32: #{tpu_custom_call.1} parent=1 // pred_region
      _
    $region33: #{tpu_custom_call.1} parent=1 // pred_fallthru
      _
    // Predicated region
    $region34: #{tpu_custom_call.1} parent=1 // pred_check
      _
    $region35: #{tpu_custom_call.1} parent=1 // pred_check_branch
      %80 = sbr.rel (0) target = $region37
    $region36: #{tpu_custom_call.1} parent=1 // pred_region
      _
    $region37: #{tpu_custom_call.1} parent=1 // pred_fallthru
      _
    // Predicated region
    $region38: #{tpu_custom_call.1} parent=1 // pred_check
      _
    $region39: #{tpu_custom_call.1} parent=1 // pred_check_branch
      %82 = sbr.rel (0) target = $region41
    $region40: #{tpu_custom_call.1} parent=1 // pred_region
      _
    $region41: #{tpu_custom_call.1} parent=1 // pred_fallthru
      _
    // Predicated region
    $region42: #{tpu_custom_call.1} parent=1 // pred_check
      _
    $region43: #{tpu_custom_call.1} parent=1 // pred_check_branch
      %84 = sbr.rel (0) target = $region45
    $region44: #{tpu_custom_call.1} parent=1 // pred_region
      %85 = dma.done [#allocation8], 128
    $region45: #{tpu_custom_call.1} parent=1 // pred_fallthru
      _
    // Predicated region
    $region46: #{tpu_custom_call.1} parent=1 // pred_check
      _
    $region47: #{tpu_custom_call.1} parent=1 // pred_check_branch
      %87 = sbr.rel (0) target = $region49
    $region48: #{tpu_custom_call.1} parent=1 // pred_region
      %88 = dma.done [#allocation11], 2048
    $region49: #{tpu_custom_call.1} parent=1 // pred_fallthru
      _
    // Predicated region
    $region50: #{tpu_custom_call.1} parent=1 // pred_check
      _
    $region51: #{tpu_custom_call.1} parent=1 // pred_check_branch
      %90 = sbr.rel (0) target = $region53
    $region52: #{tpu_custom_call.1} parent=1 // pred_region
      %91 = dma.done [#allocation11], 2048
    $region53: #{tpu_custom_call.1} parent=1 // pred_fallthru
      _
    // Predicated region
    $region54: #{tpu_custom_call.1} parent=1 // pred_check
      _
    $region55: #{tpu_custom_call.1} parent=1 // pred_check_branch
      %93 = sbr.rel (0) target = $region57
    $region56: #{tpu_custom_call.1} parent=1 // pred_region
      %94 = dma.done [#allocation14], 2048
    $region57: #{tpu_custom_call.1} parent=1 // pred_fallthru
      _
    %s95 = sld [smem:[#allocation4]]
    %s96 = sld [smem:[#allocation5]]
    %s97 = sld [smem:[#allocation6]]
    %s98 = smul.f32 %s96, 0.5
    %p99 = scmp.eq.s32.totalorder 0, 0
    %p100 = scmp.eq.s32.totalorder 0, 0
    %p101 = pnand %p99, %p100
    %p102 = pneg %p101
    %p103 = scmp.eq.s32.totalorder 0, 0
    %p104 = pnand %p102, %p103
    %p105 = pneg %p104
    // Predicated region
    $region58: #{tpu_custom_call.1} parent=1 // pred_check
      _
    $region59: #{tpu_custom_call.1} parent=1 // pred_check_branch
      %107 = sbr.rel (%p104) target = $region61
    $region60: #{tpu_custom_call.1} parent=1 // pred_region
      %vm108 = vcmask 0
      %109 = vst.msk [vmem:[#allocation3] sm:$0x1] %vm108, 0.0
    $region61: #{tpu_custom_call.1} parent=1 // pred_fallthru
      _
    // Predicated region
    $region62: #{tpu_custom_call.1} parent=1 // pred_check
      %p110 = pneg %p103
    $region63: #{tpu_custom_call.1} parent=1 // pred_check_branch
      %112 = sbr.rel (%p110) target = $region65
    $region64: #{tpu_custom_call.1} parent=1 // pred_region
      %113 = vst [vmem:[#allocation2] sm:$0xff] 0.0
    $region65: #{tpu_custom_call.1} parent=1 // pred_fallthru
      _
    %v114 = vld [vmem:[#allocation10] sm:$0xff]
    %v115 = vld [vmem:[#allocation10 + $0x8] sm:$0xff]
    %v116 = vld [vmem:[#allocation10 + $0x10] sm:$0xff]
    %v117 = vld [vmem:[#allocation10 + $0x18] sm:$0xff]
    %v118 = vld [vmem:[#allocation10 + $0x20] sm:$0xff]
    %v119 = vld [vmem:[#allocation10 + $0x28] sm:$0xff]
    %v120 = vld [vmem:[#allocation10 + $0x30] sm:$0xff]
    %v121 = vld [vmem:[#allocation10 + $0x38] sm:$0xff]
    %v122 = vld [vmem:[#allocation10 + $0x40] sm:$0xff]
    %v123 = vld [vmem:[#allocation10 + $0x48] sm:$0xff]
    %v124 = vld [vmem:[#allocation10 + $0x50] sm:$0xff]
    %v125 = vld [vmem:[#allocation10 + $0x58] sm:$0xff]
    %v126 = vld [vmem:[#allocation10 + $0x60] sm:$0xff]
    %v127 = vld [vmem:[#allocation10 + $0x68] sm:$0xff]
    %v128 = vld [vmem:[#allocation10 + $0x70] sm:$0xff]
    %v129 = vld [vmem:[#allocation10 + $0x78] sm:$0xff]
    %v130 = vld [vmem:[#allocation12] sm:$0xff]
    %v131 = vld [vmem:[#allocation12 + $0x8] sm:$0xff]
    %v132 = vld [vmem:[#allocation12 + $0x10] sm:$0xff]
    %v133 = vld [vmem:[#allocation12 + $0x18] sm:$0xff]
    %v134 = vld [vmem:[#allocation12 + $0x20] sm:$0xff]
    %v135 = vld [vmem:[#allocation12 + $0x28] sm:$0xff]
    %v136 = vld [vmem:[#allocation12 + $0x30] sm:$0xff]
    %v137 = vld [vmem:[#allocation12 + $0x38] sm:$0xff]
    %v138 = vld [vmem:[#allocation12 + $0x40] sm:$0xff]
    %v139 = vld [vmem:[#allocation12 + $0x48] sm:$0xff]
    %v140 = vld [vmem:[#allocation12 + $0x50] sm:$0xff]
    %v141 = vld [vmem:[#allocation12 + $0x58] sm:$0xff]
    %v142 = vld [vmem:[#allocation12 + $0x60] sm:$0xff]
    %v143 = vld [vmem:[#allocation12 + $0x68] sm:$0xff]
    %v144 = vld [vmem:[#allocation12 + $0x70] sm:$0xff]
    %v145 = vld [vmem:[#allocation12 + $0x78] sm:$0xff]
    %vm146 = vcmp.gt.f32.partialorder %v130, 20.0
    %vm147 = vcmp.gt.f32.partialorder %v131, 20.0
    %vm148 = vcmp.gt.f32.partialorder %v132, 20.0
    %vm149 = vcmp.gt.f32.partialorder %v133, 20.0
    %vm150 = vcmp.gt.f32.partialorder %v134, 20.0
    %vm151 = vcmp.gt.f32.partialorder %v135, 20.0
    %vm152 = vcmp.gt.f32.partialorder %v136, 20.0
    %vm153 = vcmp.gt.f32.partialorder %v137, 20.0
    %vm154 = vcmp.gt.f32.partialorder %v138, 20.0
    %vm155 = vcmp.gt.f32.partialorder %v139, 20.0
    %vm156 = vcmp.gt.f32.partialorder %v140, 20.0
    %vm157 = vcmp.gt.f32.partialorder %v141, 20.0
    %vm158 = vcmp.gt.f32.partialorder %v142, 20.0
    %vm159 = vcmp.gt.f32.partialorder %v143, 20.0
    %vm160 = vcmp.gt.f32.partialorder %v144, 20.0
    %vm161 = vcmp.gt.f32.partialorder %v145, 20.0
    %v162 = vmin.f32 %v130, 20.0
    %v163 = vmin.f32 %v131, 20.0
    %v164 = vmin.f32 %v132, 20.0
    %v165 = vmin.f32 %v133, 20.0
    %v166 = vmin.f32 %v134, 20.0
    %v167 = vmin.f32 %v135, 20.0
    %v168 = vmin.f32 %v136, 20.0
    %v169 = vmin.f32 %v137, 20.0
    %v170 = vmin.f32 %v138, 20.0
    %v171 = vmin.f32 %v139, 20.0
    %v172 = vmin.f32 %v140, 20.0
    %v173 = vmin.f32 %v141, 20.0
    %v174 = vmin.f32 %v142, 20.0
    %v175 = vmin.f32 %v143, 20.0
    %v176 = vmin.f32 %v144, 20.0
    %v177 = vmin.f32 %v145, 20.0
    %v178 = vmul.f32 %v162, 1.442695
    %v179 = vpow.pop %v178
    %v180 = vmul.f32 %v163, 1.442695
    %v181 = vpow.pop %v180
    %v182 = vmul.f32 %v164, 1.442695
    %v183 = vpow.pop %v182
    %v184 = vmul.f32 %v165, 1.442695
    %v185 = vpow.pop %v184
    %v186 = vmul.f32 %v166, 1.442695
    %v187 = vpow.pop %v186
    %v188 = vmul.f32 %v167, 1.442695
    %v189 = vpow.pop %v188
    %v190 = vmul.f32 %v168, 1.442695
    %v191 = vpow.pop %v190
    %v192 = vmul.f32 %v169, 1.442695
    %v193 = vpow.pop %v192
    %v194 = vmul.f32 %v170, 1.442695
    %v195 = vpow.pop %v194
    %v196 = vmul.f32 %v171, 1.442695
    %v197 = vpow.pop %v196
    %v198 = vmul.f32 %v172, 1.442695
    %v199 = vpow.pop %v198
    %v200 = vmul.f32 %v173, 1.442695
    %v201 = vpow.pop %v200
    %v202 = vmul.f32 %v174, 1.442695
    %v203 = vpow.pop %v202
    %v204 = vmul.f32 %v175, 1.442695
    %v205 = vpow.pop %v204
    %v206 = vmul.f32 %v176, 1.442695
    %v207 = vpow.pop %v206
    %v208 = vmul.f32 %v177, 1.442695
    %v209 = vpow.pop %v208
    %v210 = vadd.f32 %v179, 1.0
    %v211 = vlog2.pop %v210
    %v212 = vmul.f32 %v211, 0.6931472
    %v213 = vmul.f32 -0.5, %v179
    %v214 = vadd.f32 %v213, 1.0
    %v215 = vmul.f32 %v214, %v179
    %v216 = vand.u32 2147483647, %v179
    %vm217 = vcmp.lt.f32.partialorder %v216, 0.0004427343
    %v218 = vsel %vm217, %v215, %v212
    %v219 = vadd.f32 %v181, 1.0
    %v220 = vlog2.pop %v219
    %v221 = vmul.f32 %v220, 0.6931472
    %v222 = vmul.f32 -0.5, %v181
    %v223 = vadd.f32 %v222, 1.0
    %v224 = vmul.f32 %v223, %v181
    %v225 = vand.u32 2147483647, %v181
    %vm226 = vcmp.lt.f32.partialorder %v225, 0.0004427343
    %v227 = vsel %vm226, %v224, %v221
    %v228 = vadd.f32 %v183, 1.0
    %v229 = vlog2.pop %v228
    %v230 = vmul.f32 %v229, 0.6931472
    %v231 = vmul.f32 -0.5, %v183
    %v232 = vadd.f32 %v231, 1.0
    %v233 = vmul.f32 %v232, %v183
    %v234 = vand.u32 2147483647, %v183
    %vm235 = vcmp.lt.f32.partialorder %v234, 0.0004427343
    %v236 = vsel %vm235, %v233, %v230
    %v237 = vadd.f32 %v185, 1.0
    %v238 = vlog2.pop %v237
    %v239 = vmul.f32 %v238, 0.6931472
    %v240 = vmul.f32 -0.5, %v185
    %v241 = vadd.f32 %v240, 1.0
    %v242 = vmul.f32 %v241, %v185
    %v243 = vand.u32 2147483647, %v185
    %vm244 = vcmp.lt.f32.partialorder %v243, 0.0004427343
    %v245 = vsel %vm244, %v242, %v239
    %v246 = vadd.f32 %v187, 1.0
    %v247 = vlog2.pop %v246
    %v248 = vmul.f32 %v247, 0.6931472
    %v249 = vmul.f32 -0.5, %v187
    %v250 = vadd.f32 %v249, 1.0
    %v251 = vmul.f32 %v250, %v187
    %v252 = vand.u32 2147483647, %v187
    %vm253 = vcmp.lt.f32.partialorder %v252, 0.0004427343
    %v254 = vsel %vm253, %v251, %v248
    %v255 = vadd.f32 %v189, 1.0
    %v256 = vlog2.pop %v255
    %v257 = vmul.f32 %v256, 0.6931472
    %v258 = vmul.f32 -0.5, %v189
    %v259 = vadd.f32 %v258, 1.0
    %v260 = vmul.f32 %v259, %v189
    %v261 = vand.u32 2147483647, %v189
    %vm262 = vcmp.lt.f32.partialorder %v261, 0.0004427343
    %v263 = vsel %vm262, %v260, %v257
    %v264 = vadd.f32 %v191, 1.0
    %v265 = vlog2.pop %v264
    %v266 = vmul.f32 %v265, 0.6931472
    %v267 = vmul.f32 -0.5, %v191
    %v268 = vadd.f32 %v267, 1.0
    %v269 = vmul.f32 %v268, %v191
    %v270 = vand.u32 2147483647, %v191
    %vm271 = vcmp.lt.f32.partialorder %v270, 0.0004427343
    %v272 = vsel %vm271, %v269, %v266
    %v273 = vadd.f32 %v193, 1.0
    %v274 = vlog2.pop %v273
    %v275 = vmul.f32 %v274, 0.6931472
    %v276 = vmul.f32 -0.5, %v193
    %v277 = vadd.f32 %v276, 1.0
    %v278 = vmul.f32 %v277, %v193
    %v279 = vand.u32 2147483647, %v193
    %vm280 = vcmp.lt.f32.partialorder %v279, 0.0004427343
    %v281 = vsel %vm280, %v278, %v275
    %v282 = vadd.f32 %v195, 1.0
    %v283 = vlog2.pop %v282
    %v284 = vmul.f32 %v283, 0.6931472
    %v285 = vmul.f32 -0.5, %v195
    %v286 = vadd.f32 %v285, 1.0
    %v287 = vmul.f32 %v286, %v195
    %v288 = vand.u32 2147483647, %v195
    %vm289 = vcmp.lt.f32.partialorder %v288, 0.0004427343
    %v290 = vsel %vm289, %v287, %v284
    %v291 = vadd.f32 %v197, 1.0
    %v292 = vlog2.pop %v291
    %v293 = vmul.f32 %v292, 0.6931472
    %v294 = vmul.f32 -0.5, %v197
    %v295 = vadd.f32 %v294, 1.0
    %v296 = vmul.f32 %v295, %v197
    %v297 = vand.u32 2147483647, %v197
    %vm298 = vcmp.lt.f32.partialorder %v297, 0.0004427343
    %v299 = vsel %vm298, %v296, %v293
    %v300 = vadd.f32 %v199, 1.0
    %v301 = vlog2.pop %v300
    %v302 = vmul.f32 %v301, 0.6931472
    %v303 = vmul.f32 -0.5, %v199
    %v304 = vadd.f32 %v303, 1.0
    %v305 = vmul.f32 %v304, %v199
    %v306 = vand.u32 2147483647, %v199
    %vm307 = vcmp.lt.f32.partialorder %v306, 0.0004427343
    %v308 = vsel %vm307, %v305, %v302
    %v309 = vadd.f32 %v201, 1.0
    %v310 = vlog2.pop %v309
    %v311 = vmul.f32 %v310, 0.6931472
    %v312 = vmul.f32 -0.5, %v201
    %v313 = vadd.f32 %v312, 1.0
    %v314 = vmul.f32 %v313, %v201
    %v315 = vand.u32 2147483647, %v201
    %vm316 = vcmp.lt.f32.partialorder %v315, 0.0004427343
    %v317 = vsel %vm316, %v314, %v311
    %v318 = vadd.f32 %v203, 1.0
    %v319 = vlog2.pop %v318
    %v320 = vmul.f32 %v319, 0.6931472
    %v321 = vmul.f32 -0.5, %v203
    %v322 = vadd.f32 %v321, 1.0
    %v323 = vmul.f32 %v322, %v203
    %v324 = vand.u32 2147483647, %v203
    %vm325 = vcmp.lt.f32.partialorder %v324, 0.0004427343
    %v326 = vsel %vm325, %v323, %v320
    %v327 = vadd.f32 %v205, 1.0
    %v328 = vlog2.pop %v327
    %v329 = vmul.f32 %v328, 0.6931472
    %v330 = vmul.f32 -0.5, %v205
    %v331 = vadd.f32 %v330, 1.0
    %v332 = vmul.f32 %v331, %v205
    %v333 = vand.u32 2147483647, %v205
    %vm334 = vcmp.lt.f32.partialorder %v333, 0.0004427343
    %v335 = vsel %vm334, %v332, %v329
    %v336 = vadd.f32 %v207, 1.0
    %v337 = vlog2.pop %v336
    %v338 = vmul.f32 %v337, 0.6931472
    %v339 = vmul.f32 -0.5, %v207
    %v340 = vadd.f32 %v339, 1.0
    %v341 = vmul.f32 %v340, %v207
    %v342 = vand.u32 2147483647, %v207
    %vm343 = vcmp.lt.f32.partialorder %v342, 0.0004427343
    %v344 = vsel %vm343, %v341, %v338
    %v345 = vadd.f32 %v209, 1.0
    %v346 = vlog2.pop %v345
    %v347 = vmul.f32 %v346, 0.6931472
    %v348 = vmul.f32 -0.5, %v209
    %v349 = vadd.f32 %v348, 1.0
    %v350 = vmul.f32 %v349, %v209
    %v351 = vand.u32 2147483647, %v209
    %vm352 = vcmp.lt.f32.partialorder %v351, 0.0004427343
    %v353 = vsel %vm352, %v350, %v347
    %v354 = vsel %vm146, %v130, %v218
    %v355 = vsel %vm147, %v131, %v227
    %v356 = vsel %vm148, %v132, %v236
    %v357 = vsel %vm149, %v133, %v245
    %v358 = vsel %vm150, %v134, %v254
    %v359 = vsel %vm151, %v135, %v263
    %v360 = vsel %vm152, %v136, %v272
    %v361 = vsel %vm153, %v137, %v281
    %v362 = vsel %vm154, %v138, %v290
    %v363 = vsel %vm155, %v139, %v299
    %v364 = vsel %vm156, %v140, %v308
    %v365 = vsel %vm157, %v141, %v317
    %v366 = vsel %vm158, %v142, %v326
    %v367 = vsel %vm159, %v143, %v335
    %v368 = vsel %vm160, %v144, %v344
    %v369 = vsel %vm161, %v145, %v353
    %v370 = vld [vmem:[#allocation13] sm:$0xff]
    %v371 = vld [vmem:[#allocation13 + $0x8] sm:$0xff]
    %v372 = vld [vmem:[#allocation13 + $0x10] sm:$0xff]
    %v373 = vld [vmem:[#allocation13 + $0x18] sm:$0xff]
    %v374 = vld [vmem:[#allocation13 + $0x20] sm:$0xff]
    %v375 = vld [vmem:[#allocation13 + $0x28] sm:$0xff]
    %v376 = vld [vmem:[#allocation13 + $0x30] sm:$0xff]
    %v377 = vld [vmem:[#allocation13 + $0x38] sm:$0xff]
    %v378 = vld [vmem:[#allocation13 + $0x40] sm:$0xff]
    %v379 = vld [vmem:[#allocation13 + $0x48] sm:$0xff]
    %v380 = vld [vmem:[#allocation13 + $0x50] sm:$0xff]
    %v381 = vld [vmem:[#allocation13 + $0x58] sm:$0xff]
    %v382 = vld [vmem:[#allocation13 + $0x60] sm:$0xff]
    %v383 = vld [vmem:[#allocation13 + $0x68] sm:$0xff]
    %v384 = vld [vmem:[#allocation13 + $0x70] sm:$0xff]
    %v385 = vld [vmem:[#allocation13 + $0x78] sm:$0xff]
    %v386 = vmul.f32 %v354, %v370
    %v387 = vmul.f32 %v355, %v371
    %v388 = vmul.f32 %v356, %v372
    %v389 = vmul.f32 %v357, %v373
    %v390 = vmul.f32 %v358, %v374
    %v391 = vmul.f32 %v359, %v375
    %v392 = vmul.f32 %v360, %v376
    %v393 = vmul.f32 %v361, %v377
    %v394 = vmul.f32 %v362, %v378
    %v395 = vmul.f32 %v363, %v379
    %v396 = vmul.f32 %v364, %v380
    %v397 = vmul.f32 %v365, %v381
    %v398 = vmul.f32 %v366, %v382
    %v399 = vmul.f32 %v367, %v383
    %v400 = vmul.f32 %v368, %v384
    %v401 = vmul.f32 %v369, %v385
    %v402 = vadd.f32 %v114, %v386
    %v403 = vadd.f32 %v115, %v387
    %v404 = vadd.f32 %v116, %v388
    %v405 = vadd.f32 %v117, %v389
    %v406 = vadd.f32 %v118, %v390
    %v407 = vadd.f32 %v119, %v391
    %v408 = vadd.f32 %v120, %v392
    %v409 = vadd.f32 %v121, %v393
    %v410 = vadd.f32 %v122, %v394
    %v411 = vadd.f32 %v123, %v395
    %v412 = vadd.f32 %v124, %v396
    %v413 = vadd.f32 %v125, %v397
    %v414 = vadd.f32 %v126, %v398
    %v415 = vadd.f32 %v127, %v399
    %v416 = vadd.f32 %v128, %v400
    %v417 = vadd.f32 %v129, %v401
    %v418 = vld [vmem:[#allocation2] sm:$0xff]
    %v419 = vld [vmem:[#allocation7] sm:$0xff]
    %420 = vmatprep.subr.mxu0 0.0
    %421 = vmatpush1.xpose.msra.mxu0 %v417
    %422 = vmatprep.subr.mxu0 0.0
    %423 = vmatpush1.xpose.msra.mxu0 %v416
    %424 = vmatprep.subr.mxu0 0.0
    %425 = vmatpush1.xpose.msra.mxu0 %v415
    %426 = vmatprep.subr.mxu0 0.0
    %427 = vmatpush1.xpose.msra.mxu0 %v414
    %428 = vmatprep.subr.mxu0 0.0
    %429 = vmatpush1.xpose.msra.mxu0 %v413
    %430 = vmatprep.subr.mxu0 0.0
    %431 = vmatpush1.xpose.msra.mxu0 %v412
    %432 = vmatprep.subr.mxu0 0.0
    %433 = vmatpush1.xpose.msra.mxu0 %v411
    %434 = vmatprep.subr.mxu0 0.0
    %435 = vmatpush1.xpose.msra.mxu0 %v410
    %436 = vmatprep.subr.mxu0 0.0
    %437 = vmatpush1.xpose.msra.mxu0 %v409
    %438 = vmatprep.subr.mxu0 0.0
    %439 = vmatpush1.xpose.msra.mxu0 %v408
    %440 = vmatprep.subr.mxu0 0.0
    %441 = vmatpush1.xpose.msra.mxu0 %v407
    %442 = vmatprep.subr.mxu0 0.0
    %443 = vmatpush1.xpose.msra.mxu0 %v406
    %444 = vmatprep.subr.mxu0 0.0
    %445 = vmatpush1.xpose.msra.mxu0 %v405
    %446 = vmatprep.subr.mxu0 0.0
    %447 = vmatpush1.xpose.msra.mxu0 %v404
    %448 = vmatprep.subr.mxu0 0.0
    %449 = vmatpush1.xpose.msra.mxu0 %v403
    %450 = vmatprep.subr.mxu0 0.0
    %451 = vmatpush1.xpose.msra.mxu0 %v402
    %452 = vmatprep.subr.mxu0 0.0
    %453 = vmatpush2.xpose.msra.mxu0 0.0
    %454 = vmatprep.subr.mxu0 0.0
    %455 = vmatpush2.xpose.msra.mxu0 0.0
    %456 = vmatprep.subr.mxu0 0.0
    %457 = vmatpush2.xpose.msra.mxu0 0.0
    %458 = vmatprep.subr.mxu0 0.0
    %459 = vmatpush2.xpose.msra.mxu0 0.0
    %460 = vmatprep.subr.mxu0 0.0
    %461 = vmatpush2.xpose.msra.mxu0 0.0
    %462 = vmatprep.subr.mxu0 0.0
    %463 = vmatpush2.xpose.msra.mxu0 0.0
    %464 = vmatprep.subr.mxu0 0.0
    %465 = vmatpush2.xpose.msra.mxu0 0.0
    %466 = vmatprep.subr.mxu0 0.0
    %467 = vmatpush2.xpose.msra.mxu0 0.0
    %468 = vmatprep.subr.mxu0 0.0
    %469 = vmatpush2.xpose.msra.mxu0 0.0
    %470 = vmatprep.subr.mxu0 0.0
    %471 = vmatpush2.xpose.msra.mxu0 0.0
    %472 = vmatprep.subr.mxu0 0.0
    %473 = vmatpush2.xpose.msra.mxu0 0.0
    %474 = vmatprep.subr.mxu0 0.0
    %475 = vmatpush2.xpose.msra.mxu0 0.0
    %476 = vmatprep.subr.mxu0 0.0
    %477 = vmatpush2.xpose.msra.mxu0 0.0
    %478 = vmatprep.subr.mxu0 0.0
    %479 = vmatpush2.xpose.msra.mxu0 0.0
    %480 = vmatprep.subr.mxu0 0.0
    %481 = vmatpush2.xpose.msra.mxu0 0.0
    %482 = vmatprep.subr.mxu0 0.0
    %483 = vmatpush2.xpose.msra.mxu0 0.0
    %484 = vmatprep.mubr.f32.mxu0 0.0
    %485 = vmatmul.mubr.f32.gmra.mxu0 %v419
    %v486 = vpop.f32.mrf.mxu0
    %v487 = vadd.f32 0.0, %v486
    %v488 = vpop.f32.mrf.mxu0
    %489 = vdwg.mxu0
    %v490 = vadd.f32 %v418, %v487
    %491 = vst [vmem:[#allocation2] sm:$0xff] %v490
    // Predicated region
    $region66: #{tpu_custom_call.1} parent=1 // pred_check
      %p492 = pneg %p99
    $region67: #{tpu_custom_call.1} parent=1 // pred_check_branch
      %494 = sbr.rel (%p492) target = $region69
    $region68: #{tpu_custom_call.1} parent=1 // pred_region
      %v495 = vlog2.pop %v354
      %v496 = vmul.f32 %v495, 0.6931472
      %v497 = vlog2.pop %v355
      %v498 = vmul.f32 %v497, 0.6931472
      %v499 = vlog2.pop %v356
      %v500 = vmul.f32 %v499, 0.6931472
      %v501 = vlog2.pop %v357
      %v502 = vmul.f32 %v501, 0.6931472
      %v503 = vlog2.pop %v358
      %v504 = vmul.f32 %v503, 0.6931472
      %v505 = vlog2.pop %v359
      %v506 = vmul.f32 %v505, 0.6931472
      %v507 = vlog2.pop %v360
      %v508 = vmul.f32 %v507, 0.6931472
      %v509 = vlog2.pop %v361
      %v510 = vmul.f32 %v509, 0.6931472
      %v511 = vlog2.pop %v362
      %v512 = vmul.f32 %v511, 0.6931472
      %v513 = vlog2.pop %v363
      %v514 = vmul.f32 %v513, 0.6931472
      %v515 = vlog2.pop %v364
      %v516 = vmul.f32 %v515, 0.6931472
      %v517 = vlog2.pop %v365
      %v518 = vmul.f32 %v517, 0.6931472
      %v519 = vlog2.pop %v366
      %v520 = vmul.f32 %v519, 0.6931472
      %v521 = vlog2.pop %v367
      %v522 = vmul.f32 %v521, 0.6931472
      %v523 = vlog2.pop %v368
      %v524 = vmul.f32 %v523, 0.6931472
      %v525 = vlog2.pop %v369
      %v526 = vmul.f32 %v525, 0.6931472
      %v527 = vstv %s98
      %v528 = vsub.f32 %v527, %v496
      %v529 = vsub.f32 %v527, %v498
      %v530 = vsub.f32 %v527, %v500
      %v531 = vsub.f32 %v527, %v502
      %v532 = vsub.f32 %v527, %v504
      %v533 = vsub.f32 %v527, %v506
      %v534 = vsub.f32 %v527, %v508
      %v535 = vsub.f32 %v527, %v510
      %v536 = vsub.f32 %v527, %v512
      %v537 = vsub.f32 %v527, %v514
      %v538 = vsub.f32 %v527, %v516
      %v539 = vsub.f32 %v527, %v518
      %v540 = vsub.f32 %v527, %v520
      %v541 = vsub.f32 %v527, %v522
      %v542 = vsub.f32 %v527, %v524
      %v543 = vsub.f32 %v527, %v526
      %v544 = vmul.f32 %v354, %v354
      %v545 = vmul.f32 %v355, %v355
      %v546 = vmul.f32 %v356, %v356
      %v547 = vmul.f32 %v357, %v357
      %v548 = vmul.f32 %v358, %v358
      %v549 = vmul.f32 %v359, %v359
      %v550 = vmul.f32 %v360, %v360
      %v551 = vmul.f32 %v361, %v361
      %v552 = vmul.f32 %v362, %v362
      %v553 = vmul.f32 %v363, %v363
      %v554 = vmul.f32 %v364, %v364
      %v555 = vmul.f32 %v365, %v365
      %v556 = vmul.f32 %v366, %v366
      %v557 = vmul.f32 %v367, %v367
      %v558 = vmul.f32 %v368, %v368
      %v559 = vmul.f32 %v369, %v369
      %v560 = vstv %s95
      %v561 = vsub.f32 %v114, %v560
      %v562 = vsub.f32 %v115, %v560
      %v563 = vsub.f32 %v116, %v560
      %v564 = vsub.f32 %v117, %v560
      %v565 = vsub.f32 %v118, %v560
      %v566 = vsub.f32 %v119, %v560
      %v567 = vsub.f32 %v120, %v560
      %v568 = vsub.f32 %v121, %v560
      %v569 = vsub.f32 %v122, %v560
      %v570 = vsub.f32 %v123, %v560
      %v571 = vsub.f32 %v124, %v560
      %v572 = vsub.f32 %v125, %v560
      %v573 = vsub.f32 %v126, %v560
      %v574 = vsub.f32 %v127, %v560
      %v575 = vsub.f32 %v128, %v560
      %v576 = vsub.f32 %v129, %v560
      %v577 = vmul.f32 %v561, %v561
      %v578 = vmul.f32 %v562, %v562
      %v579 = vmul.f32 %v563, %v563
      %v580 = vmul.f32 %v564, %v564
      %v581 = vmul.f32 %v565, %v565
      %v582 = vmul.f32 %v566, %v566
      %v583 = vmul.f32 %v567, %v567
      %v584 = vmul.f32 %v568, %v568
      %v585 = vmul.f32 %v569, %v569
      %v586 = vmul.f32 %v570, %v570
      %v587 = vmul.f32 %v571, %v571
      %v588 = vmul.f32 %v572, %v572
      %v589 = vmul.f32 %v573, %v573
      %v590 = vmul.f32 %v574, %v574
      %v591 = vmul.f32 %v575, %v575
      %v592 = vmul.f32 %v576, %v576
      %v593 = vadd.f32 %v544, %v577
      %v594 = vadd.f32 %v545, %v578
      %v595 = vadd.f32 %v546, %v579
      %v596 = vadd.f32 %v547, %v580
      %v597 = vadd.f32 %v548, %v581
      %v598 = vadd.f32 %v549, %v582
      %v599 = vadd.f32 %v550, %v583
      %v600 = vadd.f32 %v551, %v584
      %v601 = vadd.f32 %v552, %v585
      %v602 = vadd.f32 %v553, %v586
      %v603 = vadd.f32 %v554, %v587
      %v604 = vadd.f32 %v555, %v588
      %v605 = vadd.f32 %v556, %v589
      %v606 = vadd.f32 %v557, %v590
      %v607 = vadd.f32 %v558, %v591
      %v608 = vadd.f32 %v559, %v592
      %v609 = vstv %s97
      %v610 = vmul.f32 %v593, %v609
      %v611 = vmul.f32 %v594, %v609
      %v612 = vmul.f32 %v595, %v609
      %v613 = vmul.f32 %v596, %v609
      %v614 = vmul.f32 %v597, %v609
      %v615 = vmul.f32 %v598, %v609
      %v616 = vmul.f32 %v599, %v609
      %v617 = vmul.f32 %v600, %v609
      %v618 = vmul.f32 %v601, %v609
      %v619 = vmul.f32 %v602, %v609
      %v620 = vmul.f32 %v603, %v609
      %v621 = vmul.f32 %v604, %v609
      %v622 = vmul.f32 %v605, %v609
      %v623 = vmul.f32 %v606, %v609
      %v624 = vmul.f32 %v607, %v609
      %v625 = vmul.f32 %v608, %v609
      %v626 = vadd.f32 %v528, %v610
      %v627 = vadd.f32 %v529, %v611
      %v628 = vadd.f32 %v530, %v612
      %v629 = vadd.f32 %v531, %v613
      %v630 = vadd.f32 %v532, %v614
      %v631 = vadd.f32 %v533, %v615
      %v632 = vadd.f32 %v534, %v616
      %v633 = vadd.f32 %v535, %v617
      %v634 = vadd.f32 %v536, %v618
      %v635 = vadd.f32 %v537, %v619
      %v636 = vadd.f32 %v538, %v620
      %v637 = vadd.f32 %v539, %v621
      %v638 = vadd.f32 %v540, %v622
      %v639 = vadd.f32 %v541, %v623
      %v640 = vadd.f32 %v542, %v624
      %v641 = vadd.f32 %v543, %v625
      %v642 = vsub.f32 %v626, 0.5
      %v643 = vsub.f32 %v627, 0.5
      %v644 = vsub.f32 %v628, 0.5
      %v645 = vsub.f32 %v629, 0.5
      %v646 = vsub.f32 %v630, 0.5
      %v647 = vsub.f32 %v631, 0.5
      %v648 = vsub.f32 %v632, 0.5
      %v649 = vsub.f32 %v633, 0.5
      %v650 = vsub.f32 %v634, 0.5
      %v651 = vsub.f32 %v635, 0.5
      %v652 = vsub.f32 %v636, 0.5
      %v653 = vsub.f32 %v637, 0.5
      %v654 = vsub.f32 %v638, 0.5
      %v655 = vsub.f32 %v639, 0.5
      %v656 = vsub.f32 %v640, 0.5
      %v657 = vsub.f32 %v641, 0.5
      %v658 = vlaneseq
      %v659 = vshrl.u32 %v658, 7
      %v660 = vadd.s32 %v659, 8
      %v661 = vadd.s32 %v659, 16
      %v662 = vadd.s32 %v659, 24
      %v663 = vadd.s32 %v659, 32
      %v664 = vadd.s32 %v659, 40
      %v665 = vadd.s32 %v659, 48
      %v666 = vadd.s32 %v659, 56
      %v667 = vadd.s32 %v659, 64
      %v668 = vadd.s32 %v659, 72
      %v669 = vadd.s32 %v659, 80
      %v670 = vadd.s32 %v659, 88
      %v671 = vadd.s32 %v659, 96
      %v672 = vadd.s32 %v659, 104
      %v673 = vadd.s32 %v659, 112
      %v674 = vadd.s32 %v659, 120
      %s675 = smul.u32 0, 128
      %v676 = vstv %s675
      %v677 = vadd.s32 %v659, %v676
      %v678 = vadd.s32 %v660, %v676
      %v679 = vadd.s32 %v661, %v676
      %v680 = vadd.s32 %v662, %v676
      %v681 = vadd.s32 %v663, %v676
      %v682 = vadd.s32 %v664, %v676
      %v683 = vadd.s32 %v665, %v676
      %v684 = vadd.s32 %v666, %v676
      %v685 = vadd.s32 %v667, %v676
      %v686 = vadd.s32 %v668, %v676
      %v687 = vadd.s32 %v669, %v676
      %v688 = vadd.s32 %v670, %v676
      %v689 = vadd.s32 %v671, %v676
      %v690 = vadd.s32 %v672, %v676
      %v691 = vadd.s32 %v673, %v676
      %v692 = vadd.s32 %v674, %v676
      %v693 = vlaneseq
      %v694 = vand.u32 %v693, 127
      %s695 = smul.u32 0, 128
      %v696 = vstv %s695
      %v697 = vadd.s32 %v694, %v696
      %vm698 = vcmp.lt.s32.totalorder %v677, 16
      %vm699 = vcmp.lt.s32.totalorder %v678, 16
      %vm700 = vcmp.lt.s32.totalorder %v679, 16
      %vm701 = vcmp.lt.s32.totalorder %v680, 16
      %vm702 = vcmp.lt.s32.totalorder %v681, 16
      %vm703 = vcmp.lt.s32.totalorder %v682, 16
      %vm704 = vcmp.lt.s32.totalorder %v683, 16
      %vm705 = vcmp.lt.s32.totalorder %v684, 16
      %vm706 = vcmp.lt.s32.totalorder %v685, 16
      %vm707 = vcmp.lt.s32.totalorder %v686, 16
      %vm708 = vcmp.lt.s32.totalorder %v687, 16
      %vm709 = vcmp.lt.s32.totalorder %v688, 16
      %vm710 = vcmp.lt.s32.totalorder %v689, 16
      %vm711 = vcmp.lt.s32.totalorder %v690, 16
      %vm712 = vcmp.lt.s32.totalorder %v691, 16
      %vm713 = vcmp.lt.s32.totalorder %v692, 16
      %vm714 = vcmp.lt.s32.totalorder %v697, 32
      %vm715 = vmand %vm698, %vm714
      %vm716 = vmand %vm699, %vm714
      %vm717 = vmand %vm700, %vm714
      %vm718 = vmand %vm701, %vm714
      %vm719 = vmand %vm702, %vm714
      %vm720 = vmand %vm703, %vm714
      %vm721 = vmand %vm704, %vm714
      %vm722 = vmand %vm705, %vm714
      %vm723 = vmand %vm706, %vm714
      %vm724 = vmand %vm707, %vm714
      %vm725 = vmand %vm708, %vm714
      %vm726 = vmand %vm709, %vm714
      %vm727 = vmand %vm710, %vm714
      %vm728 = vmand %vm711, %vm714
      %vm729 = vmand %vm712, %vm714
      %vm730 = vmand %vm713, %vm714
      %v731 = vsel %vm715, %v642, 0.0
      %v732 = vsel %vm716, %v643, 0.0
      %v733 = vsel %vm717, %v644, 0.0
      %v734 = vsel %vm718, %v645, 0.0
      %v735 = vsel %vm719, %v646, 0.0
      %v736 = vsel %vm720, %v647, 0.0
      %v737 = vsel %vm721, %v648, 0.0
      %v738 = vsel %vm722, %v649, 0.0
      %v739 = vsel %vm723, %v650, 0.0
      %v740 = vsel %vm724, %v651, 0.0
      %v741 = vsel %vm725, %v652, 0.0
      %v742 = vsel %vm726, %v653, 0.0
      %v743 = vsel %vm727, %v654, 0.0
      %v744 = vsel %vm728, %v655, 0.0
      %v745 = vsel %vm729, %v656, 0.0
      %v746 = vsel %vm730, %v657, 0.0
      %v747 = vld [vmem:[#allocation3] sm:$0x1]
      %v748 = vadd.f32 %v731, %v732
      %v749 = vadd.f32 %v748, %v733
      %v750 = vadd.f32 %v749, %v734
      %v751 = vadd.f32 %v750, %v735
      %v752 = vadd.f32 %v751, %v736
      %v753 = vadd.f32 %v752, %v737
      %v754 = vadd.f32 %v753, %v738
      %v755 = vadd.f32 %v754, %v739
      %v756 = vadd.f32 %v755, %v740
      %v757 = vadd.f32 %v756, %v741
      %v758 = vadd.f32 %v757, %v742
      %v759 = vadd.f32 %v758, %v743
      %v760 = vadd.f32 %v759, %v744
      %v761 = vadd.f32 %v760, %v745
      %v762 = vadd.f32 %v761, %v746
      %763 = vadd.xlane.f32.xlu0 %v762
      %v764 = vpop.xlane.xlu0 %763
      %v765 = vrot.slane %v764, 4
      %v766 = vadd.f32 %v764, %v765
      %v767 = vrot.slane %v766, 2
      %v768 = vadd.f32 %v766, %v767
      %v769 = vrot.slane %v768, 1
      %v770 = vadd.f32 %v768, %v769
      %s771 = vtos %v770
      %v772 = vstv %s771
      %v773 = vadd.f32 %v747, %v772
      %vm774 = vcmask 0
      %775 = vst.msk [vmem:[#allocation3] sm:$0x1] %vm774, %v773
    $region69: #{tpu_custom_call.1} parent=1 // pred_fallthru
      _
    %v776 = vld [vmem:[%s4] sm:$0x1]
    %v777 = vld [vmem:[%s5] sm:$0x1]
    %vm778 = vcmp.gt.f32.partialorder %v777, 20.0
    %v779 = vmin.f32 %v777, 20.0
    %v780 = vmul.f32 %v779, 1.442695
    %v781 = vpow.pop %v780
    %v782 = vadd.f32 %v781, 1.0
    %v783 = vlog2.pop %v782
    %v784 = vmul.f32 %v783, 0.6931472
    %v785 = vmul.f32 -0.5, %v781
    %v786 = vadd.f32 %v785, 1.0
    %v787 = vmul.f32 %v786, %v781
    %v788 = vand.u32 2147483647, %v781
    %vm789 = vcmp.lt.f32.partialorder %v788, 0.0004427343
    %v790 = vsel %vm789, %v787, %v784
    %v791 = vsel %vm778, %v777, %v790
    %p792 = pnand %p99, %p103
    %p793 = pneg %p792
    // Predicated region
    $region70: #{tpu_custom_call.1} parent=1 // pred_check
      _
    $region71: #{tpu_custom_call.1} parent=1 // pred_check_branch
      %795 = sbr.rel (%p792) target = $region73
    $region72: #{tpu_custom_call.1} parent=1 // pred_region
      %v796 = vlog2.pop %v791
      %v797 = vmul.f32 %v796, 0.6931472
      %v798 = vstv %s98
      %v799 = vsub.f32 %v798, %v797
      %v800 = vmul.f32 %v791, %v791
      %v801 = vstv %s95
      %v802 = vsub.f32 %v776, %v801
      %v803 = vmul.f32 %v802, %v802
      %v804 = vadd.f32 %v800, %v803
      %v805 = vstv %s97
      %v806 = vmul.f32 %v804, %v805
      %v807 = vadd.f32 %v799, %v806
      %v808 = vsub.f32 %v807, 0.5
      %v809 = vlaneseq
      %v810 = vand.u32 %v809, 127
      %s811 = smul.u32 0, 128
      %v812 = vstv %s811
      %v813 = vadd.s32 %v810, %v812
      %vm814 = vcmp.lt.s32.totalorder %v813, 16
      %v815 = vsel %vm814, %v808, 0.0
      %v816 = vld [vmem:[#allocation3] sm:$0x1]
      %vm817 = vcmask 1040384
      %v818 = vsel %vm817, %v815, 0.0
      %819 = vadd.xlane.f32.xlu0 %v818
      %v820 = vpop.xlane.xlu0 %819
      %v821 = vrot.slane %v820, 4
      %v822 = vadd.f32 %v820, %v821
      %v823 = vrot.slane %v822, 2
      %v824 = vadd.f32 %v822, %v823
      %v825 = vrot.slane %v824, 1
      %v826 = vadd.f32 %v824, %v825
      %s827 = vtos %v826
      %v828 = vstv %s827
      %v829 = vadd.f32 %v816, %v828
      %vm830 = vcmask 0
      %831 = vst.msk [vmem:[#allocation3] sm:$0x1] %vm830, %v829
    $region73: #{tpu_custom_call.1} parent=1 // pred_fallthru
      _
    // Predicated region
    $region74: #{tpu_custom_call.1} parent=1 // pred_check
      %p832 = pneg %p103
    $region75: #{tpu_custom_call.1} parent=1 // pred_check_branch
      %834 = sbr.rel (%p832) target = $region77
    $region76: #{tpu_custom_call.1} parent=1 // pred_region
      %v835 = vld [vmem:[%s6] sm:$0x1]
      %v836 = vmul.f32 %v791, %v835
      %v837 = vadd.f32 %v776, %v836
      %v838 = vld [vmem:[#allocation2] sm:$0xff]
      %v840 = vlaneseq
      %v841 = vshrl.u32 %v840, 7
      %v842 = vsub.s32 0, %v841
      %v843 = vrot.slane %v837, %v842
      %v845 = vadd.f32 %v838, %v843
      %846 = vst [vmem:[#allocation15] sm:$0xff] %v845
    $region77: #{tpu_custom_call.1} parent=1 // pred_fallthru
      _
    // Predicated region
    $region78: #{tpu_custom_call.1} parent=1 // pred_check
      _
    $region79: #{tpu_custom_call.1} parent=1 // pred_check_branch
      %848 = sbr.rel (%p104) target = $region81
    $region80: #{tpu_custom_call.1} parent=1 // pred_region
      %v849 = vld [vmem:[#allocation3] sm:$0x1]
      %s850 = smul.f32 %s95, 0.5
      %s851 = smul.f32 %s850, %s95
      %v852 = vstv %s851
      %v853 = vadd.f32 %v849, %v852
      %s854 = smul.f32 %s98, %s96
      %v855 = vstv %s854
      %v856 = vadd.f32 %v853, %v855
      %vm857 = vcmask 0
      %858 = vst.msk [vmem:[#allocation16] sm:$0x1] %vm857, %v856
    $region81: #{tpu_custom_call.1} parent=1 // pred_fallthru
      _
    // Predicated region
    $region82: #{tpu_custom_call.1} parent=1 // pred_check
      _
    $region83: #{tpu_custom_call.1} parent=1 // pred_check_branch
      %860 = sbr.rel (0) target = $region85
    $region84: #{tpu_custom_call.1} parent=1 // pred_region
      %s862 = ssub.s32 128, 128
      %863 = vsyncadd [#allocation9], %s862
      %s865 = sshll.u32 [#allocation15], 4
      %s866 = int_to_ptr.vmem [resolvable:$true] %s865
      %868 = dma.vmem_to_hbm [thread:$0]  %s866, 128, %s10, [#allocation9]
    $region85: #{tpu_custom_call.1} parent=1 // pred_fallthru
      _
    // Predicated region
    $region86: #{tpu_custom_call.1} parent=1 // pred_check
      _
    $region87: #{tpu_custom_call.1} parent=1 // pred_check_branch
      %870 = sbr.rel (0) target = $region89
    $region88: #{tpu_custom_call.1} parent=1 // pred_region
      %s872 = ssub.s32 16, 16
      %873 = vsyncadd [#allocation17], %s872
      %s875 = sshll.u32 [#allocation16], 4
      %s876 = int_to_ptr.vmem [resolvable:$true] %s875
      %878 = dma.vmem_to_hbm [thread:$0]  %s876, 16, %s11, [#allocation17]
    $region89: #{tpu_custom_call.1} parent=1 // pred_fallthru
      _
    // Predicated region
    $region90: #{tpu_custom_call.1} parent=1 // pred_check
      _
    $region91: #{tpu_custom_call.1} parent=1 // pred_check_branch
      %880 = sbr.rel (0) target = $region93
    $region92: #{tpu_custom_call.1} parent=1 // pred_region
      %881 = dma.done [#allocation9], 128
    $region93: #{tpu_custom_call.1} parent=1 // pred_fallthru
      _
    // Predicated region
    $region94: #{tpu_custom_call.1} parent=1 // pred_check
      _
    $region95: #{tpu_custom_call.1} parent=1 // pred_check_branch
      %883 = sbr.rel (0) target = $region97
    $region96: #{tpu_custom_call.1} parent=1 // pred_region
      %884 = dma.done [#allocation17], 16
    $region97: #{tpu_custom_call.1} parent=1 // pred_fallthru
      _
    %885 = vsyncpa [#allocation8], 1
    %886 = vsyncpa [#allocation11], 1
    %887 = vsyncpa [#allocation14], 1
    %888 = vsyncpa [#allocation9], 1
    %889 = vsyncpa [#allocation17], 1

</llo_original>
